<compile_context>
chip_gen: v6e
topology: v6e:2x2x1
jax: 0.10.0
libtpu: 0.0.40
codegen_flags: <defaults>
</compile_context>

<pallas_src>
import functools
import math

import jax
import jax.numpy as jnp
from jax.experimental import pallas as pl
from jax.experimental.pallas import tpu as pltpu


def _critic_kernel(n_layer, clip, xy_ref, wfc_ref, bfc_ref, *rest):
    """Fused forward pass on one batch tile (feature-major layout).

    xy_ref : (dim_xy, TB)  bf16      -- batch along lanes
    wfc_ref: (H, dim_xy)   bf16
    bfc_ref: (H, 1)        f32
    rest   = (w_main_0, b_main_0, ..., w_main_{n-1}, b_main_{n-1},
              w_out, b_out, out_ref)
    """
    main_refs = rest[: 2 * n_layer]
    w_out_ref = rest[2 * n_layer]      # (H, 1) f32
    b_out_ref = rest[2 * n_layer + 1]  # (1, 1) f32
    out_ref = rest[2 * n_layer + 2]    # (1, TB) f32

    # First layer: single fused dot over concatenated (x, y) features.
    # (H, dim_xy) @ (dim_xy, TB) -> (H, TB), f32 accumulation on the MXU.
    h = jnp.dot(wfc_ref[...], xy_ref[...],
                preferred_element_type=jnp.float32) + bfc_ref[...]
    h = jnp.maximum(h, 0.0)
    # (dropout disabled in the reference module when hyperparams=None)

    # Hidden stack: h = relu(W @ h + b); bf16 operands, f32 accumulation.
    for l in range(n_layer):
        w_ref = main_refs[2 * l]
        b_ref = main_refs[2 * l + 1]
        h = jnp.dot(w_ref[...], h.astype(jnp.bfloat16),
                    preferred_element_type=jnp.float32) + b_ref[...]
        h = jnp.maximum(h, 0.0)

    # Output head (H -> 1): VPU multiply + sublane reduction (no N=1 MXU dot).
    o = jnp.sum(h * w_out_ref[...], axis=0, keepdims=True) + b_out_ref[...]
    o = jnp.clip(o, -clip, clip)
    out_ref[...] = o.astype(out_ref.dtype)   # lane-dense (1, TB) store


def critic_layer_forward(x, y, params, *, n_layer, clip=999999.0, tile_b=None):
    """Wrapper: concat + transpose + pad in XLA, fused Pallas kernel over tiles.

    params:
      'w_fc'  : (H, dim_x + dim_y)  bf16   (PyTorch (out, in) layout)
      'b_fc'  : (H, 1)              f32
      'w_main': list of (H, H)      bf16
      'b_main': list of (H, 1)      f32
      'w_out' : (H, 1)              f32
      'b_out' : (1, 1)              f32
    """
    B = x.shape[0]
    H, dim_xy = params["w_fc"].shape

    # Pick a lane-dense batch tile (multiple of 128, capped so the per-tile
    # working set stays tiny versus even v7x's 64 MiB VMEM).
    if tile_b is None:
        tile_b = min(512, 128 * pl.cdiv(B, 128))
    grid_b = pl.cdiv(B, tile_b)
    B_pad = grid_b * tile_b

    # xy^T, batch along lanes, zero-padded to a multiple of the tile.
    xy = jnp.concatenate([x, y], axis=1)                       # (B, dim_xy)
    xy_t = jnp.pad(xy.T.astype(jnp.bfloat16),
                   ((0, 0), (0, B_pad - B)))                   # (dim_xy, B_pad)

    inputs = [xy_t, params["w_fc"], params["b_fc"]]
    in_specs = [
        pl.BlockSpec((dim_xy, tile_b), lambda i: (0, i)),      # streamed per tile
        pl.BlockSpec((H, dim_xy), lambda i: (0, 0)),           # VMEM-resident
        pl.BlockSpec((H, 1), lambda i: (0, 0)),
    ]
    for l in range(n_layer):
        inputs += [params["w_main"][l], params["b_main"][l]]
        in_specs += [pl.BlockSpec((H, H), lambda i: (0, 0)),
                     pl.BlockSpec((H, 1), lambda i: (0, 0))]
    inputs += [params["w_out"], params["b_out"]]
    in_specs += [pl.BlockSpec((H, 1), lambda i: (0, 0)),
                 pl.BlockSpec((1, 1), lambda i: (0, 0))]

    kernel = functools.partial(_critic_kernel, n_layer, float(clip))

    out_t = pl.pallas_call(
        kernel,
        out_shape=jax.ShapeDtypeStruct((1, B_pad), jnp.float32),
        grid=(grid_b,),
        in_specs=in_specs,
        out_specs=pl.BlockSpec((1, tile_b), lambda i: (0, i)),
        compiler_params=pltpu.CompilerParams(
            dimension_semantics=("parallel",)),
    )(*inputs)

    # Back to the module's (B, 1) row-major output.
    return out_t[0, :B][:, None]


def init_params(key, dim_x, dim_y, dim_hidden, n_layer):
    """Deterministic synthetic parameter init (PyTorch-Linear-like, kernel layout)."""
    dim_xy = dim_x + dim_y
    keys = jax.random.split(key, n_layer + 2)

    def lin(k, fan_in, fan_out):
        bound = 1.0 / math.sqrt(fan_in)
        kw, kb = jax.random.split(k)
        w = jax.random.uniform(kw, (fan_out, fan_in), jnp.float32, -bound, bound)
        b = jax.random.uniform(kb, (fan_out, 1), jnp.float32, -bound, bound)
        return w, b

    w_fc, b_fc = lin(keys[0], dim_xy, dim_hidden)
    params = {
        "w_fc": w_fc.astype(jnp.bfloat16),   # MXU operand -> bf16 in HBM
        "b_fc": b_fc,                        # f32
        "w_main": [],
        "b_main": [],
    }
    for l in range(n_layer):
        w, b = lin(keys[1 + l], dim_hidden, dim_hidden)
        params["w_main"].append(w.astype(jnp.bfloat16))
        params["b_main"].append(b)
    w_out, b_out = lin(keys[-1], dim_hidden, 1)
    params["w_out"] = w_out.T                # (H, 1) f32 -- used on the VPU
    params["b_out"] = b_out                  # (1, 1) f32
    return params


def reference_forward(x, y, params, *, n_layer, clip=999999.0):
    """Pure-JAX reference of the PyTorch forward (dropout disabled), using the
    same bf16-operand / f32-accumulation scheme as the kernel."""
    xy = jnp.concatenate([x, y], axis=1).astype(jnp.bfloat16)
    h = jnp.dot(xy, params["w_fc"].T,
                preferred_element_type=jnp.float32) + params["b_fc"].T
    h = jnp.maximum(h, 0.0)
    for l in range(n_layer):
        h = jnp.dot(h.astype(jnp.bfloat16), params["w_main"][l].T,
                    preferred_element_type=jnp.float32) + params["b_main"][l].T
        h = jnp.maximum(h, 0.0)
    o = jnp.sum(h * params["w_out"].T, axis=1, keepdims=True) + params["b_out"]
    return jnp.clip(o, -clip, clip)


if __name__ == "__main__":
    # Small shapes consistent with the module's forward.
    B, DIM_X, DIM_Y, H, N_LAYER = 8, 16, 16, 32, 2

    key = jax.random.PRNGKey(0)
    kx, ky, kp = jax.random.split(key, 3)
    x = jax.random.normal(kx, (B, DIM_X), jnp.float32)
    y = jax.random.normal(ky, (B, DIM_Y), jnp.float32)
    params = init_params(kp, DIM_X, DIM_Y, H, N_LAYER)

    out = critic_layer_forward(x, y, params, n_layer=N_LAYER)
    out = jax.block_until_ready(out)
    ref = reference_forward(x, y, params, n_layer=N_LAYER)
    assert out.shape == (B, 1)
    assert jnp.allclose(out, ref, atol=1e-4, rtol=1e-4), (out, ref)

    # Second check: batch that needs padding and a multi-step parallel grid.
    B2 = 300
    kx2, ky2 = jax.random.split(jax.random.PRNGKey(1))
    x2 = jax.random.normal(kx2, (B2, DIM_X), jnp.float32)
    y2 = jax.random.normal(ky2, (B2, DIM_Y), jnp.float32)
    out2 = critic_layer_forward(x2, y2, params, n_layer=N_LAYER, tile_b=128)
    out2 = jax.block_until_ready(out2)
    ref2 = reference_forward(x2, y2, params, n_layer=N_LAYER)
    assert out2.shape == (B2, 1)
    assert jnp.allclose(out2, ref2, atol=1e-4, rtol=1e-4)

    print("KERNEL_OK")
</pallas_src>

<mosaic_0001>
module attributes {stable_mosaic.version = 11 : i64} {
  func.func @_critic_kernel(%arg0: i32, %arg1: memref<32x128xbf16, #tpu.memory_space<vmem>>, %arg2: memref<32x32xbf16, #tpu.memory_space<vmem>>, %arg3: memref<32x1xf32, #tpu.memory_space<vmem>>, %arg4: memref<32x32xbf16, #tpu.memory_space<vmem>>, %arg5: memref<32x1xf32, #tpu.memory_space<vmem>>, %arg6: memref<32x32xbf16, #tpu.memory_space<vmem>>, %arg7: memref<32x1xf32, #tpu.memory_space<vmem>>, %arg8: memref<32x1xf32, #tpu.memory_space<vmem>>, %arg9: memref<1x1xf32, #tpu.memory_space<vmem>>, %arg10: memref<1x128xf32, #tpu.memory_space<vmem>>) attributes {dimension_semantics = [#tpu.dimension_semantics<parallel>], iteration_bounds = array<i64: 1>, scalar_prefetch = 0 : i64, scratch_operands = 0 : i64, tpu.core_type = #tpu.core_type<tc>, window_params = [{transform_indices = @transform_0, window_bounds = array<i64: 32, 128>}, {pipeline_mode = #tpu.pipeline_mode<synchronous>, transform_indices = @transform_1, window_bounds = array<i64: 32, 32>}, {pipeline_mode = #tpu.pipeline_mode<synchronous>, transform_indices = @transform_2, window_bounds = array<i64: 32, 1>}, {pipeline_mode = #tpu.pipeline_mode<synchronous>, transform_indices = @transform_3, window_bounds = array<i64: 32, 32>}, {pipeline_mode = #tpu.pipeline_mode<synchronous>, transform_indices = @transform_4, window_bounds = array<i64: 32, 1>}, {pipeline_mode = #tpu.pipeline_mode<synchronous>, transform_indices = @transform_5, window_bounds = array<i64: 32, 32>}, {pipeline_mode = #tpu.pipeline_mode<synchronous>, transform_indices = @transform_6, window_bounds = array<i64: 32, 1>}, {pipeline_mode = #tpu.pipeline_mode<synchronous>, transform_indices = @transform_7, window_bounds = array<i64: 32, 1>}, {pipeline_mode = #tpu.pipeline_mode<synchronous>, transform_indices = @transform_8, window_bounds = array<i64: 1, 1>}, {transform_indices = @transform_9, window_bounds = array<i64: 1, 128>}]} {
    %c0 = arith.constant 0 : index
    %c0_0 = arith.constant 0 : index
    %0 = vector.load %arg2[%c0, %c0_0] : memref<32x32xbf16, #tpu.memory_space<vmem>>, vector<32x32xbf16>
    %c0_1 = arith.constant 0 : index
    %c0_2 = arith.constant 0 : index
    %1 = vector.load %arg1[%c0_1, %c0_2] : memref<32x128xbf16, #tpu.memory_space<vmem>>, vector<32x128xbf16>
    %cst = arith.constant dense<0.000000e+00> : vector<32x128xf32>
    %2 = tpu.matmul %0, %1, %cst {dimension_numbers = #tpu.dot_dimension_numbers<[1], [0], [0], [1], [0, 0, 1, 1], [], []>} : vector<32x32xbf16>, vector<32x128xbf16>, vector<32x128xf32> -> vector<32x128xf32>
    %c0_3 = arith.constant 0 : index
    %c0_4 = arith.constant 0 : index
    %3 = vector.load %arg3[%c0_3, %c0_4] : memref<32x1xf32, #tpu.memory_space<vmem>>, vector<32x1xf32>
    %4 = vector.broadcast %3 : vector<32x1xf32> to vector<32x128xf32>
    %5 = arith.addf %2, %4 : vector<32x128xf32>
    %cst_5 = arith.constant 0.000000e+00 : f32
    %6 = vector.broadcast %cst_5 : f32 to vector<32x128xf32>
    %7 = arith.maximumf %5, %6 : vector<32x128xf32>
    %c0_6 = arith.constant 0 : index
    %c0_7 = arith.constant 0 : index
    %8 = vector.load %arg4[%c0_6, %c0_7] : memref<32x32xbf16, #tpu.memory_space<vmem>>, vector<32x32xbf16>
    %9 = arith.truncf %7 : vector<32x128xf32> to vector<32x128xbf16>
    %cst_8 = arith.constant dense<0.000000e+00> : vector<32x128xf32>
    %10 = tpu.matmul %8, %9, %cst_8 {dimension_numbers = #tpu.dot_dimension_numbers<[1], [0], [0], [1], [0, 0, 1, 1], [], []>} : vector<32x32xbf16>, vector<32x128xbf16>, vector<32x128xf32> -> vector<32x128xf32>
    %c0_9 = arith.constant 0 : index
    %c0_10 = arith.constant 0 : index
    %11 = vector.load %arg5[%c0_9, %c0_10] : memref<32x1xf32, #tpu.memory_space<vmem>>, vector<32x1xf32>
    %12 = vector.broadcast %11 : vector<32x1xf32> to vector<32x128xf32>
    %13 = arith.addf %10, %12 : vector<32x128xf32>
    %cst_11 = arith.constant 0.000000e+00 : f32
    %14 = vector.broadcast %cst_11 : f32 to vector<32x128xf32>
    %15 = arith.maximumf %13, %14 : vector<32x128xf32>
    %c0_12 = arith.constant 0 : index
    %c0_13 = arith.constant 0 : index
    %16 = vector.load %arg6[%c0_12, %c0_13] : memref<32x32xbf16, #tpu.memory_space<vmem>>, vector<32x32xbf16>
    %17 = arith.truncf %15 : vector<32x128xf32> to vector<32x128xbf16>
    %cst_14 = arith.constant dense<0.000000e+00> : vector<32x128xf32>
    %18 = tpu.matmul %16, %17, %cst_14 {dimension_numbers = #tpu.dot_dimension_numbers<[1], [0], [0], [1], [0, 0, 1, 1], [], []>} : vector<32x32xbf16>, vector<32x128xbf16>, vector<32x128xf32> -> vector<32x128xf32>
    %c0_15 = arith.constant 0 : index
    %c0_16 = arith.constant 0 : index
    %19 = vector.load %arg7[%c0_15, %c0_16] : memref<32x1xf32, #tpu.memory_space<vmem>>, vector<32x1xf32>
    %20 = vector.broadcast %19 : vector<32x1xf32> to vector<32x128xf32>
    %21 = arith.addf %18, %20 : vector<32x128xf32>
    %cst_17 = arith.constant 0.000000e+00 : f32
    %22 = vector.broadcast %cst_17 : f32 to vector<32x128xf32>
    %23 = arith.maximumf %21, %22 : vector<32x128xf32>
    %c0_18 = arith.constant 0 : index
    %c0_19 = arith.constant 0 : index
    %24 = vector.load %arg8[%c0_18, %c0_19] : memref<32x1xf32, #tpu.memory_space<vmem>>, vector<32x1xf32>
    %25 = vector.broadcast %24 : vector<32x1xf32> to vector<32x128xf32>
    %26 = arith.mulf %23, %25 : vector<32x128xf32>
    %cst_20 = arith.constant dense<0.000000e+00> : vector<128xf32>
    %27 = vector.multi_reduction <add>, %26, %cst_20 [0] : vector<32x128xf32> to vector<128xf32>
    %28 = vector.shape_cast %27 : vector<128xf32> to vector<1x128xf32>
    %c0_21 = arith.constant 0 : index
    %c0_22 = arith.constant 0 : index
    %29 = vector.load %arg9[%c0_21, %c0_22] : memref<1x1xf32, #tpu.memory_space<vmem>>, vector<1x1xf32>
    %30 = vector.broadcast %29 : vector<1x1xf32> to vector<1x128xf32>
    %31 = arith.addf %28, %30 : vector<1x128xf32>
    %cst_23 = arith.constant -9.999990e+05 : f32
    %cst_24 = arith.constant 9.999990e+05 : f32
    %32 = vector.broadcast %cst_23 : f32 to vector<1x128xf32>
    %33 = arith.maximumf %32, %31 : vector<1x128xf32>
    %34 = vector.broadcast %cst_24 : f32 to vector<1x128xf32>
    %35 = arith.minimumf %34, %33 : vector<1x128xf32>
    %c0_25 = arith.constant 0 : index
    %c0_26 = arith.constant 0 : index
    %36 = vector.load %arg10[%c0_25, %c0_26] : memref<1x128xf32, #tpu.memory_space<vmem>>, vector<1x128xf32>
    tpu.vector_store %arg10[%c0_25, %c0_26], %35 {strides = array<i32>} : memref<1x128xf32, #tpu.memory_space<vmem>>, vector<1x128xf32>,
    return
  }
  func.func @transform_0(%arg0: i32) -> (i32, i32) {
    %c0_i32 = arith.constant 0 : i32
    %c0_i32_0 = arith.constant 0 : i32
    return %c0_i32, %arg0 : i32, i32
  }
  func.func @transform_1(%arg0: i32) -> (i32, i32) {
    %c0_i32 = arith.constant 0 : i32
    %c0_i32_0 = arith.constant 0 : i32
    %c0_i32_1 = arith.constant 0 : i32
    return %c0_i32, %c0_i32_0 : i32, i32
  }
  func.func @transform_2(%arg0: i32) -> (i32, i32) {
    %c0_i32 = arith.constant 0 : i32
    %c0_i32_0 = arith.constant 0 : i32
    %c0_i32_1 = arith.constant 0 : i32
    return %c0_i32, %c0_i32_0 : i32, i32
  }
  func.func @transform_3(%arg0: i32) -> (i32, i32) {
    %c0_i32 = arith.constant 0 : i32
    %c0_i32_0 = arith.constant 0 : i32
    %c0_i32_1 = arith.constant 0 : i32
    return %c0_i32, %c0_i32_0 : i32, i32
  }
  func.func @transform_4(%arg0: i32) -> (i32, i32) {
    %c0_i32 = arith.constant 0 : i32
    %c0_i32_0 = arith.constant 0 : i32
    %c0_i32_1 = arith.constant 0 : i32
    return %c0_i32, %c0_i32_0 : i32, i32
  }
  func.func @transform_5(%arg0: i32) -> (i32, i32) {
    %c0_i32 = arith.constant 0 : i32
    %c0_i32_0 = arith.constant 0 : i32
    %c0_i32_1 = arith.constant 0 : i32
    return %c0_i32, %c0_i32_0 : i32, i32
  }
  func.func @transform_6(%arg0: i32) -> (i32, i32) {
    %c0_i32 = arith.constant 0 : i32
    %c0_i32_0 = arith.constant 0 : i32
    %c0_i32_1 = arith.constant 0 : i32
    return %c0_i32, %c0_i32_0 : i32, i32
  }
  func.func @transform_7(%arg0: i32) -> (i32, i32) {
    %c0_i32 = arith.constant 0 : i32
    %c0_i32_0 = arith.constant 0 : i32
    %c0_i32_1 = arith.constant 0 : i32
    return %c0_i32, %c0_i32_0 : i32, i32
  }
  func.func @transform_8(%arg0: i32) -> (i32, i32) {
    %c0_i32 = arith.constant 0 : i32
    %c0_i32_0 = arith.constant 0 : i32
    %c0_i32_1 = arith.constant 0 : i32
    return %c0_i32, %c0_i32_0 : i32, i32
  }
  func.func @transform_9(%arg0: i32) -> (i32, i32) {
    %c0_i32 = arith.constant 0 : i32
    %c0_i32_0 = arith.constant 0 : i32
    return %c0_i32, %arg0 : i32, i32
  }
}

</mosaic_0001>

<llo_original>
// kernel: tpu_custom_call.1
$region0: #{tpu_custom_call.1}
  #allocation0 [shape = 'u32[]', space=smem, size = 0x4, offset = 0x4, fixed_abs, tag = 'smem constant byte address 0x4 - core index']
  #allocation1 [shape = 'u32[144,128]{1,0:T(1,128)}', space=vmem, size = 0x12000, scoped, tag = 'internal scratch']
  #allocation2 [shape = 'f32[1,1]{1,0:T(1,128)S(1)}', space=vmem, size = 0x200, scoped, tag = 'scoped memory for tpu_custom_call.1']
  %s0 = inlined_call_operand.vmem [shape: bf16[32,128], index: 0, kind: input, shape index: {}]
  %s1 = inlined_call_operand.vmem [shape: bf16[32,32], index: 1, kind: input, shape index: {}]
  %s2 = inlined_call_operand.vmem [shape: f32[32,1], index: 2, kind: input, shape index: {}]
  %s3 = inlined_call_operand.vmem [shape: bf16[32,32], index: 3, kind: input, shape index: {}]
  %s4 = inlined_call_operand.vmem [shape: f32[32,1], index: 4, kind: input, shape index: {}]
  %s5 = inlined_call_operand.vmem [shape: bf16[32,32], index: 5, kind: input, shape index: {}]
  %s6 = inlined_call_operand.vmem [shape: f32[32,1], index: 6, kind: input, shape index: {}]
  %s7 = inlined_call_operand.vmem [shape: f32[32,1], index: 7, kind: input, shape index: {}]
  %s8 = inlined_call_operand.<no memory space> [shape: f32[1,1], index: 8, kind: input, shape index: {}]
  %s9 = inlined_call_operand.hbm [shape: f32[1,128], index: 9, kind: output, shape index: {}]
  %s10 = sld [smem:[#allocation0]]
  $region46: #{tpu_custom_call.1} parent=0
    _
  %s12 = ssub.s32 1, %s10
  %s13 = scalar_select 0, %s12, %s10
  %v14 = vstv %s8
  %15 = vst [vmem:[#allocation2] sm:$0x1] %v14
  $region1: #{tpu_custom_call.1} parent=0
    #allocation3 [shape = 'u8[512]{0}', space=vmem, size = 0x400, scoped, tag = 'output window, operand 0, single buffered']
    #allocation4 [shape = 's32[1]{0}', space=sflag, size = 0x4, scoped, tag = 'scoped memory for tpu_custom_call.1']
    %16 = vsyncpa [#allocation4], 0
    // Predicated region
    $region2: #{tpu_custom_call.1} parent=1 // pred_check
      _
    $region3: #{tpu_custom_call.1} parent=1 // pred_check_branch
      %18 = sbr.rel (0) target = $region5
    $region4: #{tpu_custom_call.1} parent=1 // pred_region
      _
    $region5: #{tpu_custom_call.1} parent=1 // pred_fallthru
      _
    // Predicated region
    $region6: #{tpu_custom_call.1} parent=1 // pred_check
      _
    $region7: #{tpu_custom_call.1} parent=1 // pred_check_branch
      %20 = sbr.rel (0) target = $region9
    $region8: #{tpu_custom_call.1} parent=1 // pred_region
      _
    $region9: #{tpu_custom_call.1} parent=1 // pred_fallthru
      _
    // Predicated region
    $region10: #{tpu_custom_call.1} parent=1 // pred_check
      _
    $region11: #{tpu_custom_call.1} parent=1 // pred_check_branch
      %22 = sbr.rel (0) target = $region13
    $region12: #{tpu_custom_call.1} parent=1 // pred_region
      _
    $region13: #{tpu_custom_call.1} parent=1 // pred_fallthru
      _
    // Predicated region
    $region14: #{tpu_custom_call.1} parent=1 // pred_check
      _
    $region15: #{tpu_custom_call.1} parent=1 // pred_check_branch
      %24 = sbr.rel (0) target = $region17
    $region16: #{tpu_custom_call.1} parent=1 // pred_region
      _
    $region17: #{tpu_custom_call.1} parent=1 // pred_fallthru
      _
    // Predicated region
    $region18: #{tpu_custom_call.1} parent=1 // pred_check
      _
    $region19: #{tpu_custom_call.1} parent=1 // pred_check_branch
      %26 = sbr.rel (0) target = $region21
    $region20: #{tpu_custom_call.1} parent=1 // pred_region
      _
    $region21: #{tpu_custom_call.1} parent=1 // pred_fallthru
      _
    // Predicated region
    $region22: #{tpu_custom_call.1} parent=1 // pred_check
      _
    $region23: #{tpu_custom_call.1} parent=1 // pred_check_branch
      %28 = sbr.rel (0) target = $region25
    $region24: #{tpu_custom_call.1} parent=1 // pred_region
      _
    $region25: #{tpu_custom_call.1} parent=1 // pred_fallthru
      _
    // Predicated region
    $region26: #{tpu_custom_call.1} parent=1 // pred_check
      _
    $region27: #{tpu_custom_call.1} parent=1 // pred_check_branch
      %30 = sbr.rel (0) target = $region29
    $region28: #{tpu_custom_call.1} parent=1 // pred_region
      _
    $region29: #{tpu_custom_call.1} parent=1 // pred_fallthru
      _
    // Predicated region
    $region30: #{tpu_custom_call.1} parent=1 // pred_check
      _
    $region31: #{tpu_custom_call.1} parent=1 // pred_check_branch
      %32 = sbr.rel (0) target = $region33
    $region32: #{tpu_custom_call.1} parent=1 // pred_region
      _
    $region33: #{tpu_custom_call.1} parent=1 // pred_fallthru
      _
    // Predicated region
    $region34: #{tpu_custom_call.1} parent=1 // pred_check
      _
    $region35: #{tpu_custom_call.1} parent=1 // pred_check_branch
      %34 = sbr.rel (0) target = $region37
    $region36: #{tpu_custom_call.1} parent=1 // pred_region
      _
    $region37: #{tpu_custom_call.1} parent=1 // pred_fallthru
      _
    %v36 = vld [vmem:[%s1] sm:$0xf]
    %v37 = vld [vmem:[%s1 + $0x4] sm:$0xf]
    %v38 = vld [vmem:[%s1 + $0x8] sm:$0xf]
    %v39 = vld [vmem:[%s1 + $0xc] sm:$0xf]
    %v40 = vld [vmem:[%s0] sm:$0xf]
    %v41 = vld [vmem:[%s0 + $0x4] sm:$0xf]
    %v42 = vld [vmem:[%s0 + $0x8] sm:$0xf]
    %v43 = vld [vmem:[%s0 + $0xc] sm:$0xf]
    %v44 = vld [vmem:[%s2] sm:$0xff]
    %v45 = vld [vmem:[%s2 + $0x8] sm:$0xff]
    %v46 = vld [vmem:[%s2 + $0x10] sm:$0xff]
    %v47 = vld [vmem:[%s2 + $0x18] sm:$0xff]
    %49 = vset.pattern.permute.xlu0 0
    %50 = vperm.xlu0 %49, %v44
    %v51 = vpop.permute.xlu0 %50
    %54 = vset.pattern.permute.xlu0 0
    %55 = vperm.xlu0 %54, %v45
    %v56 = vpop.permute.xlu0 %55
    %59 = vset.pattern.permute.xlu0 0
    %60 = vperm.xlu0 %59, %v46
    %v61 = vpop.permute.xlu0 %60
    %64 = vset.pattern.permute.xlu0 0
    %65 = vperm.xlu0 %64, %v47
    %v66 = vpop.permute.xlu0 %65
    %v72 = vunpack.c.l.b16 %v36
    %v73 = vunpack.c.l.b16 %v37
    %v74 = vunpack.c.l.b16 %v38
    %v75 = vunpack.c.l.b16 %v39
    %v76 = vpack.c.b16 %v73, %v72
    %v77 = vpack.c.b16 %v75, %v74
    %v82 = vunpack.c.l.b16 %v40
    %v83 = vunpack.c.l.b16 %v41
    %v84 = vunpack.c.l.b16 %v42
    %v85 = vunpack.c.l.b16 %v43
    %v86 = vpack.c.b16 %v83, %v82
    %v87 = vpack.c.b16 %v85, %v84
    %vm90 = vcmask 261120
    %v92 = vsel %vm90, %v76, 0
    %v95 = vsel %vm90, %v77, 0
    %97 = vmatprep.subr.bf16.mxu0 0
    %98 = vmatpush1.bf16.msra.mxu0 0
    %99 = vmatprep.subr.bf16.mxu0 0
    %100 = vmatpush1.bf16.msra.mxu0 0
    %101 = vmatprep.subr.bf16.mxu0 0
    %102 = vmatpush1.bf16.msra.mxu0 0
    %103 = vmatprep.subr.bf16.mxu0 0
    %104 = vmatpush1.bf16.msra.mxu0 0
    %105 = vmatprep.subr.bf16.mxu0 0
    %106 = vmatpush1.bf16.msra.mxu0 0
    %107 = vmatprep.subr.bf16.mxu0 0
    %108 = vmatpush1.bf16.msra.mxu0 0
    %109 = vmatprep.subr.bf16.mxu0 0
    %110 = vmatpush1.bf16.msra.mxu0 %v87
    %111 = vmatprep.subr.bf16.mxu0 0
    %112 = vmatpush1.bf16.msra.mxu0 %v86
    %113 = vmatprep.subr.bf16.mxu0 0
    %114 = vmatpush2.bf16.msra.mxu0 0
    %115 = vmatprep.subr.bf16.mxu0 0
    %116 = vmatpush2.bf16.msra.mxu0 0
    %117 = vmatprep.subr.bf16.mxu0 0
    %118 = vmatpush2.bf16.msra.mxu0 0
    %119 = vmatprep.subr.bf16.mxu0 0
    %120 = vmatpush2.bf16.msra.mxu0 0
    %121 = vmatprep.subr.bf16.mxu0 0
    %122 = vmatpush2.bf16.msra.mxu0 0
    %123 = vmatprep.subr.bf16.mxu0 0
    %124 = vmatpush2.bf16.msra.mxu0 0
    %125 = vmatprep.subr.bf16.mxu0 0
    %126 = vmatpush2.bf16.msra.mxu0 0
    %127 = vmatprep.subr.bf16.mxu0 0
    %128 = vmatpush2.bf16.msra.mxu0 0
    %129 = vmatprep.mubr.bf16.mxu0 0
    %130 = vmatmul.mubr.bf16.gmra.mxu0 %v92
    %v131 = vpop.f32.mrf.mxu0
    %v132 = vadd.f32 %v51, %v131
    %v133 = vpop.f32.mrf.mxu0
    %v134 = vpop.f32.mrf.mxu0
    %v135 = vadd.f32 %v56, %v134
    %v136 = vpop.f32.mrf.mxu0
    %137 = vmatprep.mubr.bf16.mxu0 0
    %138 = vmatmul.mubr.bf16.gmra.mxu0 %v95
    %v139 = vpop.f32.mrf.mxu0
    %v140 = vadd.f32 %v61, %v139
    %v141 = vpop.f32.mrf.mxu0
    %v142 = vpop.f32.mrf.mxu0
    %v143 = vadd.f32 %v66, %v142
    %v144 = vpop.f32.mrf.mxu0
    %145 = vdwg.mxu0
    %v146 = vmax.f32 %v132, 0.0
    %v147 = vmax.f32 %v135, 0.0
    %v148 = vmax.f32 %v140, 0.0
    %v149 = vmax.f32 %v143, 0.0
    %v150 = vld [vmem:[%s3] sm:$0xf]
    %v151 = vld [vmem:[%s3 + $0x4] sm:$0xf]
    %v152 = vld [vmem:[%s3 + $0x8] sm:$0xf]
    %v153 = vld [vmem:[%s3 + $0xc] sm:$0xf]
    %v154 = vpack.c.bf16 %v147, %v146
    %v155 = vpack.c.bf16 %v149, %v148
    %v156 = vld [vmem:[%s4] sm:$0xff]
    %v157 = vld [vmem:[%s4 + $0x8] sm:$0xff]
    %v158 = vld [vmem:[%s4 + $0x10] sm:$0xff]
    %v159 = vld [vmem:[%s4 + $0x18] sm:$0xff]
    %161 = vset.pattern.permute.xlu0 0
    %162 = vperm.xlu0 %161, %v156
    %v163 = vpop.permute.xlu0 %162
    %166 = vset.pattern.permute.xlu0 0
    %167 = vperm.xlu0 %166, %v157
    %v168 = vpop.permute.xlu0 %167
    %171 = vset.pattern.permute.xlu0 0
    %172 = vperm.xlu0 %171, %v158
    %v173 = vpop.permute.xlu0 %172
    %176 = vset.pattern.permute.xlu0 0
    %177 = vperm.xlu0 %176, %v159
    %v178 = vpop.permute.xlu0 %177
    %v184 = vunpack.c.l.b16 %v150
    %v185 = vunpack.c.l.b16 %v151
    %v186 = vunpack.c.l.b16 %v152
    %v187 = vunpack.c.l.b16 %v153
    %v188 = vpack.c.b16 %v185, %v184
    %v189 = vpack.c.b16 %v187, %v186
    %v191 = vsel %vm90, %v188, 0
    %v194 = vsel %vm90, %v189, 0
    %196 = vmatprep.subr.bf16.mxu0 0
    %197 = vmatpush1.bf16.msra.mxu0 0
    %198 = vmatprep.subr.bf16.mxu0 0
    %199 = vmatpush1.bf16.msra.mxu0 0
    %200 = vmatprep.subr.bf16.mxu0 0
    %201 = vmatpush1.bf16.msra.mxu0 0
    %202 = vmatprep.subr.bf16.mxu0 0
    %203 = vmatpush1.bf16.msra.mxu0 0
    %204 = vmatprep.subr.bf16.mxu0 0
    %205 = vmatpush1.bf16.msra.mxu0 0
    %206 = vmatprep.subr.bf16.mxu0 0
    %207 = vmatpush1.bf16.msra.mxu0 0
    %208 = vmatprep.subr.bf16.mxu0 0
    %209 = vmatpush1.bf16.msra.mxu0 %v155
    %210 = vmatprep.subr.bf16.mxu0 0
    %211 = vmatpush1.bf16.msra.mxu0 %v154
    %212 = vmatprep.subr.bf16.mxu0 0
    %213 = vmatpush2.bf16.msra.mxu0 0
    %214 = vmatprep.subr.bf16.mxu0 0
    %215 = vmatpush2.bf16.msra.mxu0 0
    %216 = vmatprep.subr.bf16.mxu0 0
    %217 = vmatpush2.bf16.msra.mxu0 0
    %218 = vmatprep.subr.bf16.mxu0 0
    %219 = vmatpush2.bf16.msra.mxu0 0
    %220 = vmatprep.subr.bf16.mxu0 0
    %221 = vmatpush2.bf16.msra.mxu0 0
    %222 = vmatprep.subr.bf16.mxu0 0
    %223 = vmatpush2.bf16.msra.mxu0 0
    %224 = vmatprep.subr.bf16.mxu0 0
    %225 = vmatpush2.bf16.msra.mxu0 0
    %226 = vmatprep.subr.bf16.mxu0 0
    %227 = vmatpush2.bf16.msra.mxu0 0
    %228 = vmatprep.mubr.bf16.mxu0 0
    %229 = vmatmul.mubr.bf16.gmra.mxu0 %v191
    %v230 = vpop.f32.mrf.mxu0
    %v231 = vadd.f32 %v163, %v230
    %v232 = vpop.f32.mrf.mxu0
    %v233 = vpop.f32.mrf.mxu0
    %v234 = vadd.f32 %v168, %v233
    %v235 = vpop.f32.mrf.mxu0
    %236 = vmatprep.mubr.bf16.mxu0 0
    %237 = vmatmul.mubr.bf16.gmra.mxu0 %v194
    %v238 = vpop.f32.mrf.mxu0
    %v239 = vadd.f32 %v173, %v238
    %v240 = vpop.f32.mrf.mxu0
    %v241 = vpop.f32.mrf.mxu0
    %v242 = vadd.f32 %v178, %v241
    %v243 = vpop.f32.mrf.mxu0
    %244 = vdwg.mxu0
    %v245 = vmax.f32 %v231, 0.0
    %v246 = vmax.f32 %v234, 0.0
    %v247 = vmax.f32 %v239, 0.0
    %v248 = vmax.f32 %v242, 0.0
    %v249 = vld [vmem:[%s5] sm:$0xf]
    %v250 = vld [vmem:[%s5 + $0x4] sm:$0xf]
    %v251 = vld [vmem:[%s5 + $0x8] sm:$0xf]
    %v252 = vld [vmem:[%s5 + $0xc] sm:$0xf]
    %v253 = vpack.c.bf16 %v246, %v245
    %v254 = vpack.c.bf16 %v248, %v247
    %v255 = vld [vmem:[%s6] sm:$0xff]
    %v256 = vld [vmem:[%s6 + $0x8] sm:$0xff]
    %v257 = vld [vmem:[%s6 + $0x10] sm:$0xff]
    %v258 = vld [vmem:[%s6 + $0x18] sm:$0xff]
    %260 = vset.pattern.permute.xlu0 0
    %261 = vperm.xlu0 %260, %v255
    %v262 = vpop.permute.xlu0 %261
    %265 = vset.pattern.permute.xlu0 0
    %266 = vperm.xlu0 %265, %v256
    %v267 = vpop.permute.xlu0 %266
    %270 = vset.pattern.permute.xlu0 0
    %271 = vperm.xlu0 %270, %v257
    %v272 = vpop.permute.xlu0 %271
    %275 = vset.pattern.permute.xlu0 0
    %276 = vperm.xlu0 %275, %v258
    %v277 = vpop.permute.xlu0 %276
    %v283 = vunpack.c.l.b16 %v249
    %v284 = vunpack.c.l.b16 %v250
    %v285 = vunpack.c.l.b16 %v251
    %v286 = vunpack.c.l.b16 %v252
    %v287 = vpack.c.b16 %v284, %v283
    %v288 = vpack.c.b16 %v286, %v285
    %v290 = vsel %vm90, %v287, 0
    %v293 = vsel %vm90, %v288, 0
    %295 = vmatprep.subr.bf16.mxu0 0
    %296 = vmatpush1.bf16.msra.mxu0 0
    %297 = vmatprep.subr.bf16.mxu0 0
    %298 = vmatpush1.bf16.msra.mxu0 0
    %299 = vmatprep.subr.bf16.mxu0 0
    %300 = vmatpush1.bf16.msra.mxu0 0
    %301 = vmatprep.subr.bf16.mxu0 0
    %302 = vmatpush1.bf16.msra.mxu0 0
    %303 = vmatprep.subr.bf16.mxu0 0
    %304 = vmatpush1.bf16.msra.mxu0 0
    %305 = vmatprep.subr.bf16.mxu0 0
    %306 = vmatpush1.bf16.msra.mxu0 0
    %307 = vmatprep.subr.bf16.mxu0 0
    %308 = vmatpush1.bf16.msra.mxu0 %v254
    %309 = vmatprep.subr.bf16.mxu0 0
    %310 = vmatpush1.bf16.msra.mxu0 %v253
    %311 = vmatprep.subr.bf16.mxu0 0
    %312 = vmatpush2.bf16.msra.mxu0 0
    %313 = vmatprep.subr.bf16.mxu0 0
    %314 = vmatpush2.bf16.msra.mxu0 0
    %315 = vmatprep.subr.bf16.mxu0 0
    %316 = vmatpush2.bf16.msra.mxu0 0
    %317 = vmatprep.subr.bf16.mxu0 0
    %318 = vmatpush2.bf16.msra.mxu0 0
    %319 = vmatprep.subr.bf16.mxu0 0
    %320 = vmatpush2.bf16.msra.mxu0 0
    %321 = vmatprep.subr.bf16.mxu0 0
    %322 = vmatpush2.bf16.msra.mxu0 0
    %323 = vmatprep.subr.bf16.mxu0 0
    %324 = vmatpush2.bf16.msra.mxu0 0
    %325 = vmatprep.subr.bf16.mxu0 0
    %326 = vmatpush2.bf16.msra.mxu0 0
    %327 = vmatprep.mubr.bf16.mxu0 0
    %328 = vmatmul.mubr.bf16.gmra.mxu0 %v290
    %v329 = vpop.f32.mrf.mxu0
    %v330 = vadd.f32 %v262, %v329
    %v331 = vpop.f32.mrf.mxu0
    %v332 = vpop.f32.mrf.mxu0
    %v333 = vadd.f32 %v267, %v332
    %v334 = vpop.f32.mrf.mxu0
    %335 = vmatprep.mubr.bf16.mxu0 0
    %336 = vmatmul.mubr.bf16.gmra.mxu0 %v293
    %v337 = vpop.f32.mrf.mxu0
    %v338 = vadd.f32 %v272, %v337
    %v339 = vpop.f32.mrf.mxu0
    %v340 = vpop.f32.mrf.mxu0
    %v341 = vadd.f32 %v277, %v340
    %v342 = vpop.f32.mrf.mxu0
    %343 = vdwg.mxu0
    %v344 = vmax.f32 %v330, 0.0
    %v345 = vmax.f32 %v333, 0.0
    %v346 = vmax.f32 %v338, 0.0
    %v347 = vmax.f32 %v341, 0.0
    %v348 = vld [vmem:[%s7] sm:$0xff]
    %v349 = vld [vmem:[%s7 + $0x8] sm:$0xff]
    %v350 = vld [vmem:[%s7 + $0x10] sm:$0xff]
    %v351 = vld [vmem:[%s7 + $0x18] sm:$0xff]
    %353 = vset.pattern.permute.xlu0 0
    %354 = vperm.xlu0 %353, %v348
    %v355 = vpop.permute.xlu0 %354
    %358 = vset.pattern.permute.xlu0 0
    %359 = vperm.xlu0 %358, %v349
    %v360 = vpop.permute.xlu0 %359
    %363 = vset.pattern.permute.xlu0 0
    %364 = vperm.xlu0 %363, %v350
    %v365 = vpop.permute.xlu0 %364
    %368 = vset.pattern.permute.xlu0 0
    %369 = vperm.xlu0 %368, %v351
    %v370 = vpop.permute.xlu0 %369
    %v372 = vmul.f32 %v344, %v355
    %v373 = vmul.f32 %v345, %v360
    %v374 = vmul.f32 %v346, %v365
    %v375 = vmul.f32 %v347, %v370
    %v376 = vadd.f32 %v372, %v373
    %v377 = vadd.f32 %v376, %v374
    %v378 = vadd.f32 %v377, %v375
    %v379 = vrot.slane %v378, 4
    %v380 = vadd.f32 %v378, %v379
    %v381 = vrot.slane %v380, 2
    %v382 = vadd.f32 %v380, %v381
    %v383 = vrot.slane %v382, 1
    %v384 = vadd.f32 %v382, %v383
    %v385 = vld [vmem:[#allocation2] sm:$0x1]
    %387 = vset.pattern.permute.xlu0 0
    %388 = vperm.xlu0 %387, %v385
    %v389 = vpop.permute.xlu0 %388
    %v391 = vlaneseq
    %v392 = vshrl.u32 %v391, 7
    %v393 = vsub.s32 0, %v392
    %v394 = vrot.slane %v389, %v393
    %v395 = vadd.f32 %v384, %v394
    %v396 = vmax.f32 %v395, -999999.0
    %v397 = vmin.f32 %v396, 999999.0
    %398 = vst [vmem:[#allocation3] sm:$0x1] %v397
    // Predicated region
    $region38: #{tpu_custom_call.1} parent=1 // pred_check
      _
    $region39: #{tpu_custom_call.1} parent=1 // pred_check_branch
      %400 = sbr.rel (0) target = $region41
    $region40: #{tpu_custom_call.1} parent=1 // pred_region
      %s402 = ssub.s32 16, 16
      %403 = vsyncadd [#allocation4], %s402
      %s405 = sshll.u32 [#allocation3], 4
      %s406 = int_to_ptr.vmem [resolvable:$true] %s405
      %408 = dma.vmem_to_hbm [thread:$0]  %s406, 16, %s9, [#allocation4]
    $region41: #{tpu_custom_call.1} parent=1 // pred_fallthru
      _
    // Predicated region
    $region42: #{tpu_custom_call.1} parent=1 // pred_check
      _
    $region43: #{tpu_custom_call.1} parent=1 // pred_check_branch
      %410 = sbr.rel (0) target = $region45
    $region44: #{tpu_custom_call.1} parent=1 // pred_region
      %411 = dma.done [#allocation4], 16
    $region45: #{tpu_custom_call.1} parent=1 // pred_fallthru
      _
    %412 = vsyncpa [#allocation4], 1

</llo_original>
